<compile_context>
chip_gen: v5e
topology: v5e:2x2
jax: 0.10.0
libtpu: 0.0.40
codegen_flags: <defaults>
</compile_context>

<pallas_src>
import jax
import jax.numpy as jnp
from jax.experimental import pallas as pl
from jax.experimental.pallas import tpu as pltpu

_LANES = 128


def _to_map_kernel(wb_ref, x_ref, o_ref):
    # wb_ref: SMEM (C+1,) f32  -> [w_0 .. w_{C-1}, bias]
    # x_ref : VMEM (1, C, TR, 128)  activation block, sublane/lane dense
    # o_ref : VMEM (1, TR, 128)
    C = x_ref.shape[1]
    # Per-channel ref reads + per-channel cast: each read is a dense (TR, 128)
    # tile, so the whole accumulation runs on full vregs (no sublane masking,
    # no up-front f32 copy of the entire (C, TR, 128) block).
    acc = x_ref[0, 0].astype(jnp.float32) * wb_ref[0]
    for c in range(1, C):  # unrolled: C is small and static
        acc = acc + x_ref[0, c].astype(jnp.float32) * wb_ref[c]
    acc = acc + wb_ref[C]  # bias
    o_ref[0] = jax.nn.sigmoid(acc).astype(o_ref.dtype)


def to_map_pallas(feature, weight, bias, *, target_block_bytes=2 * 1024 * 1024):
    """feature: (B, C, H, W); weight: (C,); bias: scalar. Returns (B, 1, H, W)."""
    B, C, H, W = feature.shape
    HW = H * W
    itemsize = feature.dtype.itemsize

    # Flatten spatial and pad to a multiple of 128 lanes if needed (no-op for
    # the common case; padded lanes are computed then sliced away).
    pad = (-HW) % _LANES
    HW_p = HW + pad
    x = feature.reshape(B, C, HW)
    if pad:
        x = jnp.pad(x, ((0, 0), (0, 0), (0, pad)))
    R = HW_p // _LANES                      # spatial "rows" (sublane axis)
    x4d = x.reshape(B, C, R, _LANES)        # metadata-only reshape

    # Pack weights + bias into one small vector, prefetched into SMEM.
    wb = jnp.concatenate(
        [weight.reshape(C).astype(jnp.float32),
         jnp.asarray(bias, jnp.float32).reshape(1)])

    # --- C- and VMEM-budget-aware row tile -------------------------------
    bytes_per_row = C * _LANES * itemsize           # input bytes per spatial row
    tile_rows = max(8, (target_block_bytes // max(bytes_per_row, 1)) // 8 * 8)
    if tile_rows >= R:
        tile_rows = R                               # full axis -> always legal
    else:
        # Keep enough spatial blocks so both TensorCores (v7x) and the
        # software pipeline stay busy even for tiny batches.
        desired_blocks = max(2, 8 // max(B, 1))
        if R >= desired_blocks * 8:
            max_tile = max(8, (-(-R // desired_blocks)) // 8 * 8)
            tile_rows = min(tile_rows, max_tile)
        tile_rows = max(8, (tile_rows // 8) * 8)

    grid = (B, pl.cdiv(R, tile_rows))

    # VMEM limit from the actual double-buffered blocks (+ headroom).
    in_block_bytes = C * tile_rows * _LANES * itemsize
    out_block_bytes = tile_rows * _LANES * itemsize
    vmem_bytes = 2 * (in_block_bytes + out_block_bytes) + (2 << 20)
    vmem_bytes = min(max(vmem_bytes, 4 * 1024 * 1024), 48 * 1024 * 1024)

    out3d = pl.pallas_call(
        _to_map_kernel,
        out_shape=jax.ShapeDtypeStruct((B, R, _LANES), feature.dtype),
        grid_spec=pltpu.PrefetchScalarGridSpec(
            num_scalar_prefetch=1,
            grid=grid,
            in_specs=[
                pl.BlockSpec((1, C, tile_rows, _LANES),
                             lambda b, j, wb: (b, 0, j, 0)),
            ],
            out_specs=pl.BlockSpec((1, tile_rows, _LANES),
                                   lambda b, j, wb: (b, j, 0)),
        ),
        compiler_params=pltpu.CompilerParams(
            dimension_semantics=("parallel", "parallel"),
            vmem_limit_bytes=int(vmem_bytes),
        ),
    )(wb, x4d)

    out = out3d.reshape(B, 1, HW_p)
    if pad:
        out = out[:, :, :HW]
    return out.reshape(B, 1, H, W)


if __name__ == "__main__":
    key = jax.random.PRNGKey(0)
    k_x, k_w, k_b = jax.random.split(key, 3)

    B, C, H, W = 2, 4, 16, 16
    x = jax.random.normal(k_x, (B, C, H, W), dtype=jnp.float32)

    # Deterministic "Conv2d(C, 1, kernel_size=1)" parameters.
    weight = jax.random.normal(k_w, (C,), dtype=jnp.float32) * 0.1
    bias = jax.random.normal(k_b, (), dtype=jnp.float32) * 0.1

    out = jax.block_until_ready(to_map_pallas(x, weight, bias))

    # Pure-JAX reference: 1x1 conv == channel contraction, then sigmoid.
    ref = jax.nn.sigmoid(jnp.einsum("bchw,c->bhw", x, weight) + bias)[:, None, :, :]
    assert out.shape == (B, 1, H, W)
    assert jnp.allclose(out, ref, atol=1e-5), "mismatch vs reference"

    print("KERNEL_OK")
</pallas_src>

<mosaic_0001>
module attributes {stable_mosaic.version = 11 : i64} {
  func.func @_to_map_kernel(%arg0: i32, %arg1: i32, %arg2: memref<5xf32, #tpu.memory_space<smem>>, %arg3: memref<1x4x2x128xf32, #tpu.memory_space<vmem>>, %arg4: memref<1x2x128xf32, #tpu.memory_space<vmem>>) attributes {dimension_semantics = [#tpu.dimension_semantics<parallel>, #tpu.dimension_semantics<parallel>], iteration_bounds = array<i64: 2, 1>, scalar_prefetch = 1 : i64, scratch_operands = 0 : i64, tpu.core_type = #tpu.core_type<tc>, window_params = [{transform_indices = @transform_0, window_bounds = array<i64: 1, 4, 2, 128>}, {transform_indices = @transform_1, window_bounds = array<i64: 1, 2, 128>}]} {
    %c0 = arith.constant 0 : index
    %c0_0 = arith.constant 0 : index
    %c0_1 = arith.constant 0 : index
    %c0_2 = arith.constant 0 : index
    %0 = vector.load %arg3[%c0, %c0_0, %c0_1, %c0_2] : memref<1x4x2x128xf32, #tpu.memory_space<vmem>>, vector<1x1x2x128xf32>
    %1 = vector.shape_cast %0 : vector<1x1x2x128xf32> to vector<2x128xf32>
    %c0_3 = arith.constant 0 : index
    %2 = memref.load %arg2[%c0_3] : memref<5xf32, #tpu.memory_space<smem>>
    %3 = vector.broadcast %2 : f32 to vector<2x128xf32>
    %4 = arith.mulf %1, %3 : vector<2x128xf32>
    %c0_4 = arith.constant 0 : index
    %c1 = arith.constant 1 : index
    %c0_5 = arith.constant 0 : index
    %c0_6 = arith.constant 0 : index
    %5 = vector.load %arg3[%c0_4, %c1, %c0_5, %c0_6] : memref<1x4x2x128xf32, #tpu.memory_space<vmem>>, vector<1x1x2x128xf32>
    %6 = vector.shape_cast %5 : vector<1x1x2x128xf32> to vector<2x128xf32>
    %c1_7 = arith.constant 1 : index
    %7 = memref.load %arg2[%c1_7] : memref<5xf32, #tpu.memory_space<smem>>
    %8 = vector.broadcast %7 : f32 to vector<2x128xf32>
    %9 = arith.mulf %6, %8 : vector<2x128xf32>
    %10 = arith.addf %4, %9 : vector<2x128xf32>
    %c0_8 = arith.constant 0 : index
    %c2 = arith.constant 2 : index
    %c0_9 = arith.constant 0 : index
    %c0_10 = arith.constant 0 : index
    %11 = vector.load %arg3[%c0_8, %c2, %c0_9, %c0_10] : memref<1x4x2x128xf32, #tpu.memory_space<vmem>>, vector<1x1x2x128xf32>
    %12 = vector.shape_cast %11 : vector<1x1x2x128xf32> to vector<2x128xf32>
    %c2_11 = arith.constant 2 : index
    %13 = memref.load %arg2[%c2_11] : memref<5xf32, #tpu.memory_space<smem>>
    %14 = vector.broadcast %13 : f32 to vector<2x128xf32>
    %15 = arith.mulf %12, %14 : vector<2x128xf32>
    %16 = arith.addf %10, %15 : vector<2x128xf32>
    %c0_12 = arith.constant 0 : index
    %c3 = arith.constant 3 : index
    %c0_13 = arith.constant 0 : index
    %c0_14 = arith.constant 0 : index
    %17 = vector.load %arg3[%c0_12, %c3, %c0_13, %c0_14] : memref<1x4x2x128xf32, #tpu.memory_space<vmem>>, vector<1x1x2x128xf32>
    %18 = vector.shape_cast %17 : vector<1x1x2x128xf32> to vector<2x128xf32>
    %c3_15 = arith.constant 3 : index
    %19 = memref.load %arg2[%c3_15] : memref<5xf32, #tpu.memory_space<smem>>
    %20 = vector.broadcast %19 : f32 to vector<2x128xf32>
    %21 = arith.mulf %18, %20 : vector<2x128xf32>
    %22 = arith.addf %16, %21 : vector<2x128xf32>
    %c4 = arith.constant 4 : index
    %23 = memref.load %arg2[%c4] : memref<5xf32, #tpu.memory_space<smem>>
    %24 = vector.broadcast %23 : f32 to vector<2x128xf32>
    %25 = arith.addf %22, %24 : vector<2x128xf32>
    %26 = arith.negf %25 : vector<2x128xf32>
    %27 = math.exp %26 : vector<2x128xf32>
    %cst = arith.constant 1.000000e+00 : f32
    %28 = vector.broadcast %cst : f32 to vector<2x128xf32>
    %29 = arith.addf %28, %27 : vector<2x128xf32>
    %30 = arith.divf %28, %29 : vector<2x128xf32>
    %c0_16 = arith.constant 0 : index
    %c0_17 = arith.constant 0 : index
    %c0_18 = arith.constant 0 : index
    %31 = vector.load %arg4[%c0_16, %c0_17, %c0_18] : memref<1x2x128xf32, #tpu.memory_space<vmem>>, vector<1x2x128xf32>
    %32 = vector.shape_cast %31 : vector<1x2x128xf32> to vector<2x128xf32>
    %33 = vector.shape_cast %30 : vector<2x128xf32> to vector<1x2x128xf32>
    tpu.vector_store %arg4[%c0_16, %c0_17, %c0_18], %33 {strides = array<i32>} : memref<1x2x128xf32, #tpu.memory_space<vmem>>, vector<1x2x128xf32>,
    return
  }
  func.func @transform_0(%arg0: i32, %arg1: i32, %arg2: memref<5xf32, #tpu.memory_space<smem>>) -> (i32, i32, i32, i32) {
    %c0_i32 = arith.constant 0 : i32
    %c0_i32_0 = arith.constant 0 : i32
    %c0_i32_1 = arith.constant 0 : i32
    return %arg0, %c0_i32, %arg1, %c0_i32_0 : i32, i32, i32, i32
  }
  func.func @transform_1(%arg0: i32, %arg1: i32, %arg2: memref<5xf32, #tpu.memory_space<smem>>) -> (i32, i32, i32) {
    %c0_i32 = arith.constant 0 : i32
    %c0_i32_0 = arith.constant 0 : i32
    return %arg0, %arg1, %c0_i32 : i32, i32, i32
  }
}

</mosaic_0001>

<llo_original>
// kernel: tpu_custom_call.1
$region0: #{tpu_custom_call.1}
  #allocation0 [shape = 'u32[]', space=smem, size = 0x4, offset = 0x4, fixed_abs, tag = 'smem constant byte address 0x4 - core index']
  #allocation1 [shape = 'u32[72,128]{1,0:T(1,128)}', space=vmem, size = 0x9000, scoped, tag = 'internal scratch']
  #allocation2 [shape = 's32[1]{0}', space=sflag, size = 0x4, scoped, tag = 'scoped memory for tpu_custom_call.1']
  #allocation3 [shape = 'u8[512]{0}', space=smem, size = 0x200, scoped, tag = 'prefetched SMEM operand 0']
  %s0 = inlined_call_operand.hbm [shape: f32[5], index: 0, kind: input, shape index: {}]
  %s1 = inlined_call_operand.hbm [shape: f32[2,4,2,128], index: 1, kind: input, shape index: {}]
  %s2 = inlined_call_operand.hbm [shape: f32[2,2,128], index: 2, kind: output, shape index: {}]
  %s3 = sld [smem:[#allocation0]]
  $region41: #{tpu_custom_call.1} parent=0
    _
  %s5 = ssub.s32 1, %s3
  %s6 = scalar_select 0, %s5, %s3
  %s8 = sshll.u32 %s0, 4
  %s9 = int_to_ptr.hbm [resolvable:$true] %s8
  %11 = dma.hbm_to_smem %s9, 16, [#allocation3], [#allocation2]
  %13 = dma.done [#allocation2], 16
  %14 = sfence
  $region1: #{tpu_custom_call.1} parent=0
    #allocation4 [shape = 'u8[8192]{0}', space=vmem, size = 0x2000, scoped, tag = 'input window, operand 1']
    #allocation5 [shape = 's32[2]{0}', space=sflag, size = 0x8, scoped, tag = 'scoped memory for tpu_custom_call.1']
    #allocation6 [shape = 's32[2]{0}', space=sflag, size = 0x8, scoped, tag = 'scoped memory for tpu_custom_call.1']
    #allocation7 [shape = 'u8[2048]{0}', space=vmem, size = 0x800, scoped, tag = 'output window, operand 0']
    %15 = vsyncpa [#allocation5], 0
    %s16 = scalar_lea.sflag [#allocation5], 1
    %17 = vsyncpa %s16, 0
    %18 = vsyncpa [#allocation6], 0
    %s19 = scalar_lea.sflag [#allocation6], 1
    %20 = vsyncpa %s19, 0
    loop: start=0, step=1, limit=4
    $region2: #{tpu_custom_call.1} parent=1 // loop_pre_header
      _
    $region3: #{tpu_custom_call.1} parent=1 // loop_header
      %s22 = sphi 0, %s26
      %p23 = scmp.ge.s32.totalorder %s22, 4
      %s29 = sphi 0, %s41
      %s30 = sphi 0, %s37
      %s31 = sphi 0, %s29
      %s32 = sphi 0, %s30
      %s33 = sphi 0, %s31
      %s34 = sphi 0, %s32
      %s46 = sphi 0, %s48
      %s49 = sphi 0, %s46
      %s50 = sphi 0, %s49
      %s66 = sphi 0, %s50
      %s74 = sphi 0, %s76
      %s77 = sphi 0, %s74
      %s78 = sphi 0, %s77
      %s94 = sphi 0, %s78
    $region4: #{tpu_custom_call.1} parent=1 // loop_header_branch
      %25 = sbr.rel (%p23) target = $region8
    $region5: #{tpu_custom_call.1} parent=1 // loop_body
      %s27 = ssub.s32 %s22, 1
      %s28 = ssub.s32 %s22, 2
      %s35 = sadd.s32 1, %s30
      %p36 = scmp.ge.s32.totalorder %s35, 1
      %s37 = scalar_select %p36, 0, %s35
      %s38 = sadd.s32 1, %s29
      %s39 = scalar_select %p36, %s38, %s29
      %p40 = scmp.ge.s32.totalorder %s39, 2
      %s41 = scalar_select %p40, 0, %s39
      %s42 = ssub.s32 %s29, %s41
      %s43 = ssub.s32 %s30, %s37
      %s44 = sor.u32 %s42, %s43
      %p45 = scmp.eq.s32.totalorder %s44, 0
      %s47 = sadd.s32 %s46, 1
      %s48 = scalar_select %p45, %s46, %s47
      %p51 = pneg %p45
      %p52 = scmp.eq.s32.totalorder %s22, 1
      %p53 = por %p51, %p52
      %p54 = scmp.ne.s32.totalorder %s46, %s49
      %p55 = scmp.eq.s32.totalorder %s22, 0
      %p56 = por %p54, %p55
      %p57 = scmp.ne.s32.totalorder %s46, %s49
      %p58 = scmp.eq.s32.totalorder %s27, 1
      %p59 = por %p57, %p58
      %p60 = scmp.ne.s32.totalorder %s49, %s50
      %p61 = scmp.eq.s32.totalorder %s27, 0
      %p62 = por %p60, %p61
      %p63 = scmp.ne.s32.totalorder %s49, %s50
      %p64 = scmp.eq.s32.totalorder %s28, 1
      %p65 = por %p63, %p64
      %p67 = scmp.ne.s32.totalorder %s50, %s66
      %p68 = scmp.eq.s32.totalorder %s28, 0
      %p69 = por %p67, %p68
      %s70 = ssub.s32 %s29, %s41
      %s71 = ssub.s32 %s30, %s37
      %s72 = sor.u32 %s70, %s71
      %p73 = scmp.eq.s32.totalorder %s72, 0
      %s75 = sadd.s32 %s74, 1
      %s76 = scalar_select %p73, %s74, %s75
      %p79 = pneg %p73
      %p80 = scmp.eq.s32.totalorder %s22, 1
      %p81 = por %p79, %p80
      %p82 = scmp.ne.s32.totalorder %s74, %s77
      %p83 = scmp.eq.s32.totalorder %s22, 0
      %p84 = por %p82, %p83
      %p85 = scmp.ne.s32.totalorder %s74, %s77
      %p86 = scmp.eq.s32.totalorder %s27, 1
      %p87 = por %p85, %p86
      %p88 = scmp.ne.s32.totalorder %s77, %s78
      %p89 = scmp.eq.s32.totalorder %s27, 0
      %p90 = por %p88, %p89
      %p91 = scmp.ne.s32.totalorder %s77, %s78
      %p92 = scmp.eq.s32.totalorder %s28, 1
      %p93 = por %p91, %p92
      %p95 = scmp.ne.s32.totalorder %s78, %s94
      %p96 = scmp.eq.s32.totalorder %s28, 0
      %p97 = por %p95, %p96
      %p98 = scmp.le.s32.totalorder 1, %s22
      %p99 = scmp.lt.s32.totalorder %s22, 3
      %p100 = pnand %p98, %p99
      %p101 = pneg %p100
      // Predicated region
      $region9: #{tpu_custom_call.1} parent=5 // pred_check
        _
      $region10: #{tpu_custom_call.1} parent=5 // pred_check_branch
        %103 = sbr.rel (%p100) target = $region12
      $region11: #{tpu_custom_call.1} parent=5 // pred_region
        %s104 = ssub.s32 %s22, 1
      $region12: #{tpu_custom_call.1} parent=5 // pred_fallthru
        _
      %p105 = scmp.lt.s32.totalorder %s22, 2
      // Predicated region
      $region13: #{tpu_custom_call.1} parent=5 // pred_check
        %p106 = pneg %p105
      $region14: #{tpu_custom_call.1} parent=5 // pred_check_branch
        %108 = sbr.rel (%p106) target = $region16
      $region15: #{tpu_custom_call.1} parent=5 // pred_region
        // Predicated region
        $region17: #{tpu_custom_call.1} parent=15 // pred_check
          %p109 = pneg %p56
        $region18: #{tpu_custom_call.1} parent=15 // pred_check_branch
          %111 = sbr.rel (%p109) target = $region20
        $region19: #{tpu_custom_call.1} parent=15 // pred_region
          %s112 = sand.u32 %s46, 1
          %s113 = scalar_lea.sflag [#allocation5], %s112
          %s114 = sand.u32 %s46, 1
          %s115 = smul.addr %s114, 8
          %s116 = scalar_lea.vmem [#allocation4], %s115
          %118 = vsyncadd %s113, 0
          %s119 = smul.addr %s29, 4
          %s120 = sadd.s32 %s30, %s119
          %s121 = smul.addr %s120, 2
          %s122 = scalar_lea.hbm %s1, %s121
          %s123 = sshll.u32 %s122, 4
          %s124 = int_to_ptr.hbm [resolvable:$true] %s123
          %s125 = sshll.u32 %s116, 4
          %s126 = int_to_ptr.vmem [resolvable:$true] %s125
          %131 = dma.hbm_to_vmem [thread:$0]  %s124, 128, %s126, %s113, 32, 32, 2
        $region20: #{tpu_custom_call.1} parent=15 // pred_fallthru
          _
      $region16: #{tpu_custom_call.1} parent=5 // pred_fallthru
        _
      %p132 = scmp.le.s32.totalorder 1, %s22
      %p133 = scmp.lt.s32.totalorder %s22, 3
      %p134 = pnand %p132, %p133
      %p135 = pneg %p134
      // Predicated region
      $region21: #{tpu_custom_call.1} parent=5 // pred_check
        _
      $region22: #{tpu_custom_call.1} parent=5 // pred_check_branch
        %137 = sbr.rel (%p134) target = $region24
      $region23: #{tpu_custom_call.1} parent=5 // pred_region
        %s138 = ssub.s32 %s22, 1
        %s139 = sand.u32 %s49, 1
        %s140 = scalar_lea.sflag [#allocation5], %s139
        %s141 = sand.u32 %s49, 1
        %s142 = smul.addr %s141, 8
        %s143 = scalar_lea.vmem [#allocation4], %s142
        // Predicated region
        $region25: #{tpu_custom_call.1} parent=23 // pred_check
          %p144 = pneg %p62
        $region26: #{tpu_custom_call.1} parent=23 // pred_check_branch
          %146 = sbr.rel (%p144) target = $region28
        $region27: #{tpu_custom_call.1} parent=23 // pred_region
          %148 = dma.done %s140, 128
        $region28: #{tpu_custom_call.1} parent=23 // pred_fallthru
          _
        %s149 = sand.u32 %s49, 1
        %s150 = scalar_lea.sflag [#allocation5], %s149
        %s151 = sand.u32 %s49, 1
        %s152 = smul.addr %s151, 8
        %s153 = scalar_lea.vmem [#allocation4], %s152
        %p154 = pneg %p62
        %p155 = pneg %p59
        %p156 = pneg %p90
        %p157 = pneg %p87
        %s158 = sand.u32 %s77, 1
        %s159 = scalar_lea.sflag [#allocation6], %s158
        %s160 = sand.u32 %s77, 1
        %s161 = smul.addr %s160, 2
        %s162 = scalar_lea.vmem [#allocation7], %s161
        %v163 = vld [vmem:[%s143] sm:$0x3]
        %s164 = sld [smem:[#allocation3]]
        %v165 = vstv %s164
        %v166 = vmul.f32 %v163, %v165
        %s167 = scalar_lea.vmem %s143, 2 [#allocation4]
        %v168 = vld [vmem:[%s167] sm:$0x3]
        %s169 = sld [smem:[#allocation3 + $0x1]]
        %v170 = vstv %s169
        %v171 = vmul.f32 %v168, %v170
        %v172 = vadd.f32 %v166, %v171
        %s173 = scalar_lea.vmem %s143, 4 [#allocation4]
        %v174 = vld [vmem:[%s173] sm:$0x3]
        %s175 = sld [smem:[#allocation3 + $0x2]]
        %v176 = vstv %s175
        %v177 = vmul.f32 %v174, %v176
        %v178 = vadd.f32 %v172, %v177
        %s179 = scalar_lea.vmem %s143, 6 [#allocation4]
        %v180 = vld [vmem:[%s179] sm:$0x3]
        %s181 = sld [smem:[#allocation3 + $0x3]]
        %v182 = vstv %s181
        %v183 = vmul.f32 %v180, %v182
        %v184 = vadd.f32 %v178, %v183
        %s185 = sld [smem:[#allocation3 + $0x4]]
        %v186 = vstv %s185
        %v187 = vadd.f32 %v184, %v186
        %v188 = vxor.u32 %v187, 2147483648
        %v189 = vmul.f32 %v188, 1.442695
        %v190 = vpow.pop %v189
        %v191 = vadd.f32 %v190, 1.0
        %v192 = vrcp.pop %v191
        %v193 = vmul.f32 %v191, %v192
        %v194 = vsub.f32 1.0, %v193
        %v195 = vmul.f32 %v192, %v194
        %v196 = vadd.f32 %v192, %v195
        %vm197 = vweird.f32 %v191
        %vm198 = vweird.f32 %v192
        %vm199 = vmor %vm197, %vm198
        %v200 = vsel %vm199, %v192, %v196
        %v201 = vand.u32 2147483647, %v191
        %vm202 = vcmp.eq.f32.partialorder %v201, 8.507059e+37
        %v203 = vand.u32 %v191, 2147483648
        %v204 = vor.u32 1.1754944e-38, %v203
        %v205 = vsel %vm202, %v204, %v200
        %v206 = vmul.f32 1.0, %v205
        %207 = vst [vmem:[%s162] sm:$0x3] %v206
        %s208 = sand.u32 %s77, 1
        %s209 = scalar_lea.sflag [#allocation6], %s208
        %s210 = sand.u32 %s77, 1
        %s211 = smul.addr %s210, 2
        %s212 = scalar_lea.vmem [#allocation7], %s211
        // Predicated region
        $region29: #{tpu_custom_call.1} parent=23 // pred_check
          %p213 = pneg %p87
        $region30: #{tpu_custom_call.1} parent=23 // pred_check_branch
          %215 = sbr.rel (%p213) target = $region32
        $region31: #{tpu_custom_call.1} parent=23 // pred_region
          %217 = vsyncadd %s209, 0
          %s218 = sadd.s32 %s32, %s31
          %s219 = smul.addr %s218, 2
          %s220 = scalar_lea.hbm %s2, %s219
          %s222 = sshll.u32 %s212, 4
          %s223 = int_to_ptr.vmem [resolvable:$true] %s222
          %s224 = sshll.u32 %s220, 4
          %s225 = int_to_ptr.hbm [resolvable:$true] %s224
          %227 = dma.vmem_to_hbm [thread:$0]  %s223, 32, %s225, %s209
        $region32: #{tpu_custom_call.1} parent=23 // pred_fallthru
          _
      $region24: #{tpu_custom_call.1} parent=5 // pred_fallthru
        _
      %p228 = scmp.le.s32.totalorder 2, %s22
      // Predicated region
      $region33: #{tpu_custom_call.1} parent=5 // pred_check
        %p229 = pneg %p228
      $region34: #{tpu_custom_call.1} parent=5 // pred_check_branch
        %231 = sbr.rel (%p229) target = $region36
      $region35: #{tpu_custom_call.1} parent=5 // pred_region
        %s232 = ssub.s32 %s22, 2
        // Predicated region
        $region37: #{tpu_custom_call.1} parent=35 // pred_check
          %p233 = pneg %p93
        $region38: #{tpu_custom_call.1} parent=35 // pred_check_branch
          %235 = sbr.rel (%p233) target = $region40
        $region39: #{tpu_custom_call.1} parent=35 // pred_region
          %s236 = sand.u32 %s78, 1
          %s237 = scalar_lea.sflag [#allocation6], %s236
          %s238 = sand.u32 %s78, 1
          %s239 = smul.addr %s238, 2
          %s240 = scalar_lea.vmem [#allocation7], %s239
          %242 = dma.done %s237, 32
        $region40: #{tpu_custom_call.1} parent=35 // pred_fallthru
          _
      $region36: #{tpu_custom_call.1} parent=5 // pred_fallthru
        _
    $region6: #{tpu_custom_call.1} parent=1 // loop_footer
      %s26 = sadd.s32 1, %s22
    $region7: #{tpu_custom_call.1} parent=1 // loop_footer_branch
      %21 = sbr.rel target = $region3
    $region8: #{tpu_custom_call.1} parent=1 // loop_exit
      _
    %243 = vsyncpa [#allocation5], 1
    %s244 = scalar_lea.sflag [#allocation5], 1
    %245 = vsyncpa %s244, 1
    %246 = vsyncpa [#allocation6], 1
    %s247 = scalar_lea.sflag [#allocation6], 1
    %248 = vsyncpa %s247, 1

</llo_original>
